<compile_context>
chip_gen: v6e
topology: v6e:2x2x1
jax: 0.10.0
libtpu: 0.0.40
codegen_flags: <defaults>
</compile_context>

<pallas_src>
import functools

import jax
import jax.numpy as jnp
from jax import lax
from jax.experimental import pallas as pl
from jax.experimental.pallas import tpu as pltpu
from jax.scipy.special import digamma, gammaln

# ---------------- config (small, TPU-friendly shapes) ----------------
BATCH = 2
SEQ = 8                   # encoder input sequence length
TGT_SEQ = 8               # target sequence length
NUM_COMPRESS = 2          # num_compress_token
HIDDEN = 128              # model.config.hidden_size
VOCAB = 256               # vocab size (last NUM_COMPRESS ids are the <EMBEDi> tokens)
PAD_ID = 0
LANE = 128                # TPU lane width (lane-dense scalar outputs)
EMBED_TOKEN_IDS = [VOCAB - NUM_COMPRESS + i for i in range(NUM_COMPRESS)]

_VMEM = pl.BlockSpec(memory_space=pltpu.MemorySpace.VMEM)
_CPARAMS = pltpu.CompilerParams(vmem_limit_bytes=32 * 1024 * 1024)


def _round_up(n, mult):
    return ((n + mult - 1) // mult) * mult


def _pad_rows(x, mult=8, fill=0):
    """Pad the leading (rows) dim up to a multiple of `mult` (sublane alignment)."""
    r = x.shape[0]
    rp = _round_up(r, mult)
    if rp == r:
        return x
    cfg = [(0, rp - r)] + [(0, 0)] * (x.ndim - 1)
    return jnp.pad(x, cfg, constant_values=fill)


# ---------------- Pallas kernels ----------------
def _compress_head_kernel(x_ref, we_ref, be_ref, wm_ref, bm_ref, wk_ref, bk_ref,
                          mean_ref, kappa_ref):
    """Encoder stand-in dense+tanh -> mean_layer + L2-normalize -> kappa head (fused)."""
    x = x_ref[...]                                            # (R, H) bf16
    # encoder stand-in: dense + tanh (bf16 matmul, f32 accumulate).
    # NOTE: tanh kept in f32 (v5e has no bf16 VPU/EUP); on v6e/v7x a bf16 tanh would
    # also be fine and remove one cast pass.
    h = jnp.tanh(jnp.dot(x, we_ref[...], preferred_element_type=jnp.float32)
                 + be_ref[...])                               # (R, H) f32
    # mean = mean_layer(h); mean /= ||mean|| (eps inside rsqrt avoids inf/NaN)
    m = jnp.dot(h.astype(jnp.bfloat16), wm_ref[...],
                preferred_element_type=jnp.float32) + bm_ref[...]
    inv_norm = lax.rsqrt(jnp.sum(m * m, axis=-1, keepdims=True) + 1e-12)
    mean_ref[...] = m * inv_norm
    # kappa = exp(kappa_layer(h)): (H,1) matmul replaced by elementwise mul +
    # lane reduction (VPU + XLU) -- no wasted MXU pass, no N=1 output tile.
    lk = jnp.sum(h * wk_ref[...], axis=-1, keepdims=True) + bk_ref[...]   # (R, 1)
    # clamp before exp: no-op for sane log-kappa, guards against inf kappa poisoning
    # the beta sampler / KL once real weights are loaded.
    kappa = jnp.exp(jnp.minimum(lk, 80.0))
    # broadcast along lanes so the store is lane-dense (unmasked vst).
    kappa_ref[...] = jnp.broadcast_to(kappa, kappa_ref.shape)


def pallas_compress_head(x_pad, params):
    r, h = x_pad.shape
    return pl.pallas_call(
        _compress_head_kernel,
        out_shape=(jax.ShapeDtypeStruct((r, h), jnp.float32),
                   jax.ShapeDtypeStruct((r, LANE), jnp.float32)),
        in_specs=[_VMEM] * 7,
        out_specs=(_VMEM, _VMEM),
        compiler_params=_CPARAMS,
    )(x_pad,
      params["enc_w"], params["enc_b"].reshape(1, h),
      params["mean_w"], params["mean_b"].reshape(1, h),
      params["kappa_w"].reshape(1, h), params["kappa_b"].reshape(1, 1))


def _decoder_lm_ce_kernel(n_compress, x_ref, labels_ref,
                          wdecl_ref, bdecl_ref, wbody_ref, bbody_ref,
                          wlm_ref, blm_ref, logits_ref, loss_ref):
    """decoder_layer (leading compress block) -> decoder dense+tanh -> LM head -> CE."""
    x = x_ref[...]                                            # (R, H) bf16
    # decoder_layer applied only to the leading compress block (static, tile-aligned
    # slice); the wrapper re-ordered rows so the b*t compress rows sit at the top,
    # which is valid because the decoder stand-in is per-token.
    x_c = x[:n_compress]                                      # (C, H) bf16
    x_t = x[n_compress:]                                      # (R-C, H) bf16
    xc = (jnp.dot(x_c, wdecl_ref[...], preferred_element_type=jnp.float32)
          + bdecl_ref[...]).astype(jnp.bfloat16)
    xd = jnp.concatenate([xc, x_t], axis=0)                   # (R, H) bf16

    # TODO(synk): frozen AutoModelForCausalLM decoder cannot be reproduced;
    # stand-in = one dense+tanh layer followed by the LM-head projection.
    h = jnp.tanh(jnp.dot(xd, wbody_ref[...], preferred_element_type=jnp.float32)
                 + bbody_ref[...])                            # (R, H) f32
    logits = jnp.dot(h.astype(jnp.bfloat16), wlm_ref[...],
                     preferred_element_type=jnp.float32) + blm_ref[...]   # (R, V) f32
    logits_ref[...] = logits.astype(logits_ref.dtype)

    # Shifted cross-entropy, ignore_index=-100 (labels arrive pre-shifted per row;
    # padded rows and each sequence's last position carry -100). CE math stays f32.
    labels = labels_ref[...]                                  # (R, 1) int32
    m = jnp.max(logits, axis=-1, keepdims=True)
    lse = jnp.log(jnp.sum(jnp.exp(logits - m), axis=-1, keepdims=True)) + m
    vocab_idx = lax.broadcasted_iota(jnp.int32, logits.shape, 1)
    label_logit = jnp.sum(jnp.where(vocab_idx == labels, logits, 0.0),
                          axis=-1, keepdims=True)
    nll = lse - label_logit                                   # (R, 1)
    valid = (labels != -100).astype(jnp.float32)
    # NOTE: if every label is -100 this returns 0.0 (torch would return NaN).
    loss = jnp.sum(nll * valid) / jnp.maximum(jnp.sum(valid), 1.0)
    # lane-dense scalar store (no masked 1-lane vst).
    loss_ref[...] = jnp.broadcast_to(jnp.reshape(loss, (1, 1)), loss_ref.shape)


def pallas_decoder_lm_ce(dec_in_pad, labels_pad, n_compress_pad, params):
    r, h = dec_in_pad.shape
    v = params["lm_w"].shape[1]
    kernel = functools.partial(_decoder_lm_ce_kernel, n_compress_pad)
    return pl.pallas_call(
        kernel,
        out_shape=(jax.ShapeDtypeStruct((r, v), jnp.bfloat16),
                   jax.ShapeDtypeStruct((1, LANE), jnp.float32)),
        in_specs=[_VMEM] * 8,
        out_specs=(_VMEM, _VMEM),
        compiler_params=_CPARAMS,
    )(dec_in_pad, labels_pad,
      params["declayer_w"], params["declayer_b"].reshape(1, h),
      params["decbody_w"], params["decbody_b"].reshape(1, h),
      params["lm_w"], params["lm_b"].reshape(1, v))


# ---------------- plain-JAX glue (distributions etc.) ----------------
def power_spherical_rsample(mu, kappa, key):
    """PowerSpherical(mu, kappa).rsample() — mu: (N, d) unit vectors, kappa: (N,)."""
    # TODO(synk): beta/gamma sampling has no Pallas lowering; kept in plain JAX.
    n, d = mu.shape
    k1, k2 = jax.random.split(key)
    alpha = (d - 1.0) / 2.0 + kappa
    beta = jnp.full_like(kappa, (d - 1.0) / 2.0)
    z = jax.random.beta(k1, alpha, beta)                      # (N,)
    t = 2.0 * z - 1.0
    v = jax.random.normal(k2, (n, d - 1), dtype=mu.dtype)
    v = v / jnp.linalg.norm(v, axis=-1, keepdims=True)
    y = jnp.concatenate(
        [t[:, None], jnp.sqrt(jnp.clip(1.0 - t * t, 0.0))[:, None] * v], axis=-1)
    e1 = jnp.zeros((n, d), dtype=mu.dtype).at[:, 0].set(1.0)
    u = e1 - mu
    u = u / (jnp.linalg.norm(u, axis=-1, keepdims=True) + 1e-12)
    return y - 2.0 * jnp.sum(u * y, axis=-1, keepdims=True) * u


def kl_power_spherical_uniform(kappa, d):
    """KL(PowerSpherical(., kappa) || HypersphericalUniform(d-1)) — analytic."""
    # TODO(synk): digamma/lgamma have no Pallas lowering; kept in plain JAX.
    alpha = (d - 1.0) / 2.0 + kappa
    beta = (d - 1.0) / 2.0
    log_norm = -((alpha + beta) * jnp.log(2.0) + gammaln(alpha)
                 - gammaln(alpha + beta) + beta * jnp.log(jnp.pi))
    entropy_p = -(log_norm + kappa * (jnp.log(2.0) + digamma(alpha)
                                      - digamma(alpha + beta)))
    entropy_q = jnp.log(2.0) + (d / 2.0) * jnp.log(jnp.pi) - gammaln(d / 2.0)
    return -entropy_p + entropy_q


def init_params(key):
    ks = jax.random.split(key, 8)
    s = 0.02
    bf = jnp.bfloat16
    return {
        # embedding table + matmul weights stored bf16 (MXU-native, halves gather/DMA
        # bytes); biases and the elementwise kappa weight stay f32.
        "embed_table": (jax.random.normal(ks[0], (VOCAB, HIDDEN), jnp.float32) * s).astype(bf),
        "enc_w": (jax.random.normal(ks[1], (HIDDEN, HIDDEN), jnp.float32) * s).astype(bf),
        "enc_b": jnp.zeros((HIDDEN,), jnp.float32),
        "mean_w": (jax.random.normal(ks[2], (HIDDEN, HIDDEN), jnp.float32) * s).astype(bf),
        "mean_b": jnp.zeros((HIDDEN,), jnp.float32),
        "kappa_w": jax.random.normal(ks[3], (HIDDEN, 1), jnp.float32) * s,
        "kappa_b": jnp.zeros((1,), jnp.float32),
        "declayer_w": (jax.random.normal(ks[4], (HIDDEN, HIDDEN), jnp.float32) * s).astype(bf),
        "declayer_b": jnp.zeros((HIDDEN,), jnp.float32),
        "decbody_w": (jax.random.normal(ks[5], (HIDDEN, HIDDEN), jnp.float32) * s).astype(bf),
        "decbody_b": jnp.zeros((HIDDEN,), jnp.float32),
        "lm_w": (jax.random.normal(ks[6], (HIDDEN, VOCAB), jnp.float32) * s).astype(bf),
        "lm_b": jnp.zeros((VOCAB,), jnp.float32),
    }


# ---------------- forward (mirrors CompressWithDiffTokenvMFModel.forward) ----------------
def forward(params, input_ids, attention_mask, target_ids, target_attention_mask,
            labels, sample_key):
    b, s = input_ids.shape
    t, h = NUM_COMPRESS, HIDDEN
    st = target_ids.shape[1]

    # ----- _compress: place <EMBEDi> tokens at the end of each sequence -----
    lengths = attention_mask.sum(axis=1)
    embedding_ids = jnp.concatenate(
        [input_ids, jnp.full((b, t), PAD_ID, dtype=input_ids.dtype)], axis=1)
    emb_mask = jnp.concatenate(
        [attention_mask, jnp.zeros((b, t), dtype=attention_mask.dtype)], axis=1)
    insert_indices = lengths[:, None] + jnp.arange(t, dtype=lengths.dtype)[None, :]
    rows = jnp.arange(b)[:, None]
    embed_ids = jnp.asarray(EMBED_TOKEN_IDS, dtype=input_ids.dtype)
    embedding_ids = embedding_ids.at[rows, insert_indices].set(
        jnp.broadcast_to(embed_ids, (b, t)))
    emb_mask = emb_mask.at[rows, insert_indices].set(1)
    del emb_mask  # TODO(synk): attention mask is only consumed by the real encoder.

    # TODO(synk): the full AutoModel transformer encoder has no Pallas equivalent;
    # the stand-in is a per-token dense+tanh, so only the gathered <EMBEDi> positions
    # need encoding (gather-then-encode == encode-then-gather for a per-token op).
    compress_token_ids = embedding_ids[rows, insert_indices]                 # (B, T)
    head_in = params["embed_table"][compress_token_ids].reshape(b * t, h)    # bf16
    head_in_pad = _pad_rows(head_in, mult=8)                                 # rows -> mult of 8

    mean_pad, kappa_pad = pallas_compress_head(head_in_pad, params)
    mean = mean_pad[:b * t]                                                  # (B*T, H) f32
    kappa = kappa_pad[:b * t, 0]                                             # (B*T,)  f32

    # ----- PowerSpherical posterior sample -----
    # TODO(synk): could be fused into kernel 2 with pltpu.prng_* + a Marsaglia-Tsang
    # beta sampler to avoid the mean/kappa/z HBM round trip dominating wall-clock.
    z = power_spherical_rsample(mean, kappa, sample_key)                     # (B*T, H) f32

    # ----- fused decoder_layer (compress block) + decoder stand-in + LM head + CE -----
    # Rows are re-ordered so the b*t compress rows form one contiguous leading block
    # (valid because the decoder stand-in is per-token); the declayer matmul then runs
    # only on that static slice, and logits are reassembled into (B, T+St, V) after.
    target_embeddings = params["embed_table"][target_ids]                    # (B, St, H) bf16
    decoder_attention_mask = jnp.concatenate(
        [jnp.ones((b, t), dtype=jnp.int32), target_attention_mask], axis=1)
    del decoder_attention_mask  # TODO(synk): consumed only by the real causal-LM decoder.

    c_pad = _round_up(b * t, 16)  # 16-row multiple keeps the bf16 slice boundary tile-aligned
    z_rows = _pad_rows(z.astype(jnp.bfloat16), mult=16)                      # (c_pad, H)
    tgt_rows = _pad_rows(target_embeddings.reshape(b * st, h), mult=8)       # (t_pad, H)
    dec_in_pad = jnp.concatenate([z_rows, tgt_rows], axis=0)

    # Shifted labels matched to the re-ordered row layout: row (b, i) pairs logits[b, i]
    # with labels[b, i+1]; each sequence's last position gets ignore_index=-100.
    row_labels = jnp.concatenate(
        [labels[:, 1:], jnp.full((b, 1), -100, dtype=jnp.int32)], axis=1)    # (B, T+St)
    lbl_c = _pad_rows(row_labels[:, :t].reshape(-1, 1), mult=16, fill=-100)
    lbl_t = _pad_rows(row_labels[:, t:].reshape(-1, 1), mult=8, fill=-100)
    labels_pad = jnp.concatenate([lbl_c, lbl_t], axis=0)

    logits_pad, loss_mat = pallas_decoder_lm_ce(dec_in_pad, labels_pad, c_pad, params)
    logits_c = logits_pad[:b * t].reshape(b, t, VOCAB)
    logits_t = logits_pad[c_pad:c_pad + b * st].reshape(b, st, VOCAB)
    logits = jnp.concatenate([logits_c, logits_t], axis=1)                   # (B, T+St, V)
    loss = loss_mat[0, 0]

    # ----- KL(posterior || hyperspherical uniform) -----
    loss_kl = jnp.mean(kl_power_spherical_uniform(kappa, h))
    return loss, logits, loss_kl


if __name__ == "__main__":
    key = jax.random.PRNGKey(0)
    pkey, ikey, tkey, skey = jax.random.split(key, 4)
    params = init_params(pkey)

    input_ids = jax.random.randint(ikey, (BATCH, SEQ), 1, VOCAB - NUM_COMPRESS,
                                   dtype=jnp.int32)
    lengths = jnp.array([5, SEQ], dtype=jnp.int32)
    attention_mask = (jnp.arange(SEQ)[None, :] < lengths[:, None]).astype(jnp.int32)

    target_ids = jax.random.randint(tkey, (BATCH, TGT_SEQ), 1, VOCAB - NUM_COMPRESS,
                                    dtype=jnp.int32)
    target_attention_mask = jnp.ones((BATCH, TGT_SEQ), dtype=jnp.int32)
    labels = jnp.concatenate(
        [jnp.full((BATCH, NUM_COMPRESS), -100, dtype=jnp.int32),
         jnp.where(target_attention_mask == 1, target_ids, -100).astype(jnp.int32)],
        axis=1)

    fwd = jax.jit(forward)
    loss, logits, loss_kl = fwd(params, input_ids, attention_mask, target_ids,
                                target_attention_mask, labels, skey)
    jax.block_until_ready((loss, logits, loss_kl))
    assert logits.shape == (BATCH, NUM_COMPRESS + TGT_SEQ, VOCAB)
    assert bool(jnp.isfinite(loss)) and bool(jnp.isfinite(loss_kl))
    print("KERNEL_OK")
</pallas_src>

<mosaic_0001>
module attributes {stable_mosaic.version = 11 : i64} {
  func.func @_compress_head_kernel(%arg0: memref<8x128xbf16, #tpu.memory_space<vmem>>, %arg1: memref<128x128xbf16, #tpu.memory_space<vmem>>, %arg2: memref<1x128xf32, #tpu.memory_space<vmem>>, %arg3: memref<128x128xbf16, #tpu.memory_space<vmem>>, %arg4: memref<1x128xf32, #tpu.memory_space<vmem>>, %arg5: memref<1x128xf32, #tpu.memory_space<vmem>>, %arg6: memref<1x1xf32, #tpu.memory_space<vmem>>, %arg7: memref<8x128xf32, #tpu.memory_space<vmem>>, %arg8: memref<8x128xf32, #tpu.memory_space<vmem>>) attributes {dimension_semantics = [], scalar_prefetch = 0 : i64, scratch_operands = 0 : i64, tpu.core_type = #tpu.core_type<tc>} {
    %c0 = arith.constant 0 : index
    %c0_0 = arith.constant 0 : index
    %0 = vector.load %arg0[%c0, %c0_0] : memref<8x128xbf16, #tpu.memory_space<vmem>>, vector<8x128xbf16>
    %c0_1 = arith.constant 0 : index
    %c0_2 = arith.constant 0 : index
    %1 = vector.load %arg1[%c0_1, %c0_2] : memref<128x128xbf16, #tpu.memory_space<vmem>>, vector<128x128xbf16>
    %cst = arith.constant dense<0.000000e+00> : vector<8x128xf32>
    %2 = tpu.matmul %0, %1, %cst {dimension_numbers = #tpu.dot_dimension_numbers<[1], [0], [0], [1], [0, 0, 1, 1], [], []>} : vector<8x128xbf16>, vector<128x128xbf16>, vector<8x128xf32> -> vector<8x128xf32>
    %c0_3 = arith.constant 0 : index
    %c0_4 = arith.constant 0 : index
    %3 = vector.load %arg2[%c0_3, %c0_4] : memref<1x128xf32, #tpu.memory_space<vmem>>, vector<1x128xf32>
    %4 = vector.broadcast %3 : vector<1x128xf32> to vector<8x128xf32>
    %5 = arith.addf %2, %4 : vector<8x128xf32>
    %6 = math.tanh %5 : vector<8x128xf32>
    %7 = arith.truncf %6 : vector<8x128xf32> to vector<8x128xbf16>
    %c0_5 = arith.constant 0 : index
    %c0_6 = arith.constant 0 : index
    %8 = vector.load %arg3[%c0_5, %c0_6] : memref<128x128xbf16, #tpu.memory_space<vmem>>, vector<128x128xbf16>
    %cst_7 = arith.constant dense<0.000000e+00> : vector<8x128xf32>
    %9 = tpu.matmul %7, %8, %cst_7 {dimension_numbers = #tpu.dot_dimension_numbers<[1], [0], [0], [1], [0, 0, 1, 1], [], []>} : vector<8x128xbf16>, vector<128x128xbf16>, vector<8x128xf32> -> vector<8x128xf32>
    %c0_8 = arith.constant 0 : index
    %c0_9 = arith.constant 0 : index
    %10 = vector.load %arg4[%c0_8, %c0_9] : memref<1x128xf32, #tpu.memory_space<vmem>>, vector<1x128xf32>
    %11 = vector.broadcast %10 : vector<1x128xf32> to vector<8x128xf32>
    %12 = arith.addf %9, %11 : vector<8x128xf32>
    %13 = arith.mulf %12, %12 : vector<8x128xf32>
    %cst_10 = arith.constant dense<0.000000e+00> : vector<8xf32>
    %14 = vector.multi_reduction <add>, %13, %cst_10 [1] : vector<8x128xf32> to vector<8xf32>
    %15 = vector.shape_cast %14 : vector<8xf32> to vector<8x1xf32>
    %cst_11 = arith.constant 9.99999996E-13 : f32
    %16 = vector.broadcast %cst_11 : f32 to vector<8x1xf32>
    %17 = arith.addf %15, %16 : vector<8x1xf32>
    %18 = math.rsqrt %17 : vector<8x1xf32>
    %19 = vector.broadcast %18 : vector<8x1xf32> to vector<8x128xf32>
    %20 = arith.mulf %12, %19 : vector<8x128xf32>
    %c0_12 = arith.constant 0 : index
    %c0_13 = arith.constant 0 : index
    %21 = vector.load %arg7[%c0_12, %c0_13] : memref<8x128xf32, #tpu.memory_space<vmem>>, vector<8x128xf32>
    tpu.vector_store %arg7[%c0_12, %c0_13], %20 {strides = array<i32>} : memref<8x128xf32, #tpu.memory_space<vmem>>, vector<8x128xf32>,
    %c0_14 = arith.constant 0 : index
    %c0_15 = arith.constant 0 : index
    %22 = vector.load %arg5[%c0_14, %c0_15] : memref<1x128xf32, #tpu.memory_space<vmem>>, vector<1x128xf32>
    %23 = vector.broadcast %22 : vector<1x128xf32> to vector<8x128xf32>
    %24 = arith.mulf %6, %23 : vector<8x128xf32>
    %cst_16 = arith.constant dense<0.000000e+00> : vector<8xf32>
    %25 = vector.multi_reduction <add>, %24, %cst_16 [1] : vector<8x128xf32> to vector<8xf32>
    %26 = vector.shape_cast %25 : vector<8xf32> to vector<8x1xf32>
    %c0_17 = arith.constant 0 : index
    %c0_18 = arith.constant 0 : index
    %27 = vector.load %arg6[%c0_17, %c0_18] : memref<1x1xf32, #tpu.memory_space<vmem>>, vector<1x1xf32>
    %28 = vector.broadcast %27 : vector<1x1xf32> to vector<8x1xf32>
    %29 = arith.addf %26, %28 : vector<8x1xf32>
    %cst_19 = arith.constant 8.000000e+01 : f32
    %30 = vector.broadcast %cst_19 : f32 to vector<8x1xf32>
    %31 = arith.minimumf %29, %30 : vector<8x1xf32>
    %32 = math.exp %31 : vector<8x1xf32>
    %33 = vector.shape_cast %32 : vector<8x1xf32> to vector<8x1xf32>
    %34 = vector.broadcast %33 : vector<8x1xf32> to vector<8x128xf32>
    %c0_20 = arith.constant 0 : index
    %c0_21 = arith.constant 0 : index
    %35 = vector.load %arg8[%c0_20, %c0_21] : memref<8x128xf32, #tpu.memory_space<vmem>>, vector<8x128xf32>
    tpu.vector_store %arg8[%c0_20, %c0_21], %34 {strides = array<i32>} : memref<8x128xf32, #tpu.memory_space<vmem>>, vector<8x128xf32>,
    return
  }
}

module attributes {stable_mosaic.version = 11 : i64} {
  func.func @_decoder_lm_ce_kernel(%arg0: memref<32x128xbf16, #tpu.memory_space<vmem>>, %arg1: memref<32x1xi32, #tpu.memory_space<vmem>>, %arg2: memref<128x128xbf16, #tpu.memory_space<vmem>>, %arg3: memref<1x128xf32, #tpu.memory_space<vmem>>, %arg4: memref<128x128xbf16, #tpu.memory_space<vmem>>, %arg5: memref<1x128xf32, #tpu.memory_space<vmem>>, %arg6: memref<128x256xbf16, #tpu.memory_space<vmem>>, %arg7: memref<1x256xf32, #tpu.memory_space<vmem>>, %arg8: memref<32x256xbf16, #tpu.memory_space<vmem>>, %arg9: memref<1x128xf32, #tpu.memory_space<vmem>>) attributes {dimension_semantics = [], scalar_prefetch = 0 : i64, scratch_operands = 0 : i64, tpu.core_type = #tpu.core_type<tc>} {
    %c0 = arith.constant 0 : index
    %c0_0 = arith.constant 0 : index
    %0 = vector.load %arg0[%c0, %c0_0] : memref<32x128xbf16, #tpu.memory_space<vmem>>, vector<32x128xbf16>
    %1 = vector.extract_strided_slice %0 {offsets = [0, 0], sizes = [16, 128], strides = [1, 1]} : vector<32x128xbf16> to vector<16x128xbf16>
    %2 = vector.extract_strided_slice %0 {offsets = [16, 0], sizes = [16, 128], strides = [1, 1]} : vector<32x128xbf16> to vector<16x128xbf16>
    %c0_1 = arith.constant 0 : index
    %c0_2 = arith.constant 0 : index
    %3 = vector.load %arg2[%c0_1, %c0_2] : memref<128x128xbf16, #tpu.memory_space<vmem>>, vector<128x128xbf16>
    %cst = arith.constant dense<0.000000e+00> : vector<16x128xf32>
    %4 = tpu.matmul %1, %3, %cst {dimension_numbers = #tpu.dot_dimension_numbers<[1], [0], [0], [1], [0, 0, 1, 1], [], []>} : vector<16x128xbf16>, vector<128x128xbf16>, vector<16x128xf32> -> vector<16x128xf32>
    %c0_3 = arith.constant 0 : index
    %c0_4 = arith.constant 0 : index
    %5 = vector.load %arg3[%c0_3, %c0_4] : memref<1x128xf32, #tpu.memory_space<vmem>>, vector<1x128xf32>
    %6 = vector.broadcast %5 : vector<1x128xf32> to vector<16x128xf32>
    %7 = arith.addf %4, %6 : vector<16x128xf32>
    %8 = arith.truncf %7 : vector<16x128xf32> to vector<16x128xbf16>
    %9 = tpu.concatenate %8, %2 in 0 : vector<16x128xbf16>, vector<16x128xbf16> -> vector<32x128xbf16>
    %c0_5 = arith.constant 0 : index
    %c0_6 = arith.constant 0 : index
    %10 = vector.load %arg4[%c0_5, %c0_6] : memref<128x128xbf16, #tpu.memory_space<vmem>>, vector<128x128xbf16>
    %cst_7 = arith.constant dense<0.000000e+00> : vector<32x128xf32>
    %11 = tpu.matmul %9, %10, %cst_7 {dimension_numbers = #tpu.dot_dimension_numbers<[1], [0], [0], [1], [0, 0, 1, 1], [], []>} : vector<32x128xbf16>, vector<128x128xbf16>, vector<32x128xf32> -> vector<32x128xf32>
    %c0_8 = arith.constant 0 : index
    %c0_9 = arith.constant 0 : index
    %12 = vector.load %arg5[%c0_8, %c0_9] : memref<1x128xf32, #tpu.memory_space<vmem>>, vector<1x128xf32>
    %13 = vector.broadcast %12 : vector<1x128xf32> to vector<32x128xf32>
    %14 = arith.addf %11, %13 : vector<32x128xf32>
    %15 = math.tanh %14 : vector<32x128xf32>
    %16 = arith.truncf %15 : vector<32x128xf32> to vector<32x128xbf16>
    %c0_10 = arith.constant 0 : index
    %c0_11 = arith.constant 0 : index
    %17 = vector.load %arg6[%c0_10, %c0_11] : memref<128x256xbf16, #tpu.memory_space<vmem>>, vector<128x256xbf16>
    %cst_12 = arith.constant dense<0.000000e+00> : vector<32x256xf32>
    %18 = tpu.matmul %16, %17, %cst_12 {dimension_numbers = #tpu.dot_dimension_numbers<[1], [0], [0], [1], [0, 0, 1, 1], [], []>} : vector<32x128xbf16>, vector<128x256xbf16>, vector<32x256xf32> -> vector<32x256xf32>
    %c0_13 = arith.constant 0 : index
    %c0_14 = arith.constant 0 : index
    %19 = vector.load %arg7[%c0_13, %c0_14] : memref<1x256xf32, #tpu.memory_space<vmem>>, vector<1x256xf32>
    %20 = vector.broadcast %19 : vector<1x256xf32> to vector<32x256xf32>
    %21 = arith.addf %18, %20 : vector<32x256xf32>
    %22 = arith.truncf %21 : vector<32x256xf32> to vector<32x256xbf16>
    %c0_15 = arith.constant 0 : index
    %c0_16 = arith.constant 0 : index
    %23 = vector.load %arg8[%c0_15, %c0_16] : memref<32x256xbf16, #tpu.memory_space<vmem>>, vector<32x256xbf16>
    tpu.vector_store %arg8[%c0_15, %c0_16], %22 {strides = array<i32>} : memref<32x256xbf16, #tpu.memory_space<vmem>>, vector<32x256xbf16>,
    %c0_17 = arith.constant 0 : index
    %c0_18 = arith.constant 0 : index
    %24 = vector.load %arg1[%c0_17, %c0_18] : memref<32x1xi32, #tpu.memory_space<vmem>>, vector<32x1xi32>
    %cst_19 = arith.constant dense<0xFF800000> : vector<32xf32>
    %25 = vector.multi_reduction <maximumf>, %21, %cst_19 [1] : vector<32x256xf32> to vector<32xf32>
    %26 = vector.shape_cast %25 : vector<32xf32> to vector<32x1xf32>
    %27 = vector.broadcast %26 : vector<32x1xf32> to vector<32x256xf32>
    %28 = arith.subf %21, %27 : vector<32x256xf32>
    %29 = math.exp %28 : vector<32x256xf32>
    %cst_20 = arith.constant dense<0.000000e+00> : vector<32xf32>
    %30 = vector.multi_reduction <add>, %29, %cst_20 [1] : vector<32x256xf32> to vector<32xf32>
    %31 = vector.shape_cast %30 : vector<32xf32> to vector<32x1xf32>
    %32 = math.log %31 : vector<32x1xf32>
    %33 = arith.addf %32, %26 : vector<32x1xf32>
    %34 = tpu.iota {dimensions = array<i32: 1>} : vector<32x256xi32>
    %35 = vector.broadcast %24 : vector<32x1xi32> to vector<32x256xi32>
    %36 = arith.cmpi eq, %34, %35 : vector<32x256xi32>
    %cst_21 = arith.constant 0.000000e+00 : f32
    %37 = vector.broadcast %cst_21 : f32 to vector<32x256xf32>
    %38 = arith.select %36, %21, %37 : vector<32x256xi1>, vector<32x256xf32>
    %cst_22 = arith.constant dense<0.000000e+00> : vector<32xf32>
    %39 = vector.multi_reduction <add>, %38, %cst_22 [1] : vector<32x256xf32> to vector<32xf32>
    %40 = vector.shape_cast %39 : vector<32xf32> to vector<32x1xf32>
    %41 = arith.subf %33, %40 : vector<32x1xf32>
    %c-100_i32 = arith.constant -100 : i32
    %42 = vector.broadcast %c-100_i32 : i32 to vector<32x1xi32>
    %43 = arith.cmpi ne, %24, %42 : vector<32x1xi32>
    %44 = arith.extui %43 : vector<32x1xi1> to vector<32x1xi32>
    %45 = arith.sitofp %44 : vector<32x1xi32> to vector<32x1xf32>
    %46 = arith.mulf %41, %45 : vector<32x1xf32>
    %47 = vector.shape_cast %46 : vector<32x1xf32> to vector<1x32x1xf32>
    %cst_23 = arith.constant dense<0.000000e+00> : vector<1xf32>
    %48 = vector.multi_reduction <add>, %47, %cst_23 [1, 2] : vector<1x32x1xf32> to vector<1xf32>
    %49 = vector.shape_cast %48 : vector<1xf32> to vector<1x1x1xf32>
    %50 = vector.extract %49[0, 0, 0] : f32 from vector<1x1x1xf32>
    %51 = vector.shape_cast %45 : vector<32x1xf32> to vector<1x32x1xf32>
    %cst_24 = arith.constant dense<0.000000e+00> : vector<1xf32>
    %52 = vector.multi_reduction <add>, %51, %cst_24 [1, 2] : vector<1x32x1xf32> to vector<1xf32>
    %53 = vector.shape_cast %52 : vector<1xf32> to vector<1x1x1xf32>
    %54 = vector.extract %53[0, 0, 0] : f32 from vector<1x1x1xf32>
    %cst_25 = arith.constant 1.000000e+00 : f32
    %55 = arith.maximumf %54, %cst_25 : f32
    %56 = arith.divf %50, %55 : f32
    %57 = vector.broadcast %56 : f32 to vector<1x1xf32>
    %58 = vector.shape_cast %57 : vector<1x1xf32> to vector<1x1xf32>
    %59 = vector.broadcast %58 : vector<1x1xf32> to vector<1x128xf32>
    %c0_26 = arith.constant 0 : index
    %c0_27 = arith.constant 0 : index
    %60 = vector.load %arg9[%c0_26, %c0_27] : memref<1x128xf32, #tpu.memory_space<vmem>>, vector<1x128xf32>
    tpu.vector_store %arg9[%c0_26, %c0_27], %59 {strides = array<i32>} : memref<1x128xf32, #tpu.memory_space<vmem>>, vector<1x128xf32>,
    return
  }
}

</mosaic_0001>

<llo_original>
// kernel: forward.2
$region0: #{forward.2}
  #allocation0 [shape = 'u32[]', space=smem, size = 0x4, offset = 0x4, fixed_abs, tag = 'smem constant byte address 0x4 - core index']
  #allocation1 [shape = 'u32[144,128]{1,0:T(1,128)}', space=vmem, size = 0x12000, scoped, tag = 'internal scratch']
  #allocation2 [shape = 'f32[1,1]{1,0:T(1,128)S(1)}', space=vmem, size = 0x200, scoped, tag = 'scoped memory for forward.2']
  %s0 = inlined_call_operand.vmem [shape: bf16[8,128], index: 0, kind: input, shape index: {}]
  %s1 = inlined_call_operand.vmem [shape: bf16[128,128], index: 1, kind: input, shape index: {}]
  %s2 = inlined_call_operand.vmem [shape: f32[1,128], index: 2, kind: input, shape index: {}]
  %s3 = inlined_call_operand.vmem [shape: bf16[128,128], index: 3, kind: input, shape index: {}]
  %s4 = inlined_call_operand.vmem [shape: f32[1,128], index: 4, kind: input, shape index: {}]
  %s5 = inlined_call_operand.vmem [shape: f32[1,128], index: 5, kind: input, shape index: {}]
  %s6 = inlined_call_operand.<no memory space> [shape: f32[1,1], index: 6, kind: input, shape index: {}]
  %s7 = inlined_call_operand.vmem [shape: f32[8,128], index: 7, kind: output, shape index: {0}]
  %s8 = inlined_call_operand.vmem [shape: f32[8,128], index: 8, kind: output, shape index: {1}]
  %9 = xla_tuple %s7, %s8
  %s10 = sld [smem:[#allocation0]]
  $region46: #{forward.2} parent=0
    _
  %s12 = ssub.s32 1, %s10
  %s13 = scalar_select 0, %s12, %s10
  %v14 = vstv %s6
  %15 = vst [vmem:[#allocation2] sm:$0x1] %v14
  // Predicated region
  $region2: #{forward.2} parent=0 // pred_check
    _
  $region3: #{forward.2} parent=0 // pred_check_branch
    %17 = sbr.rel (0) target = $region5
  $region4: #{forward.2} parent=0 // pred_region
    _
  $region5: #{forward.2} parent=0 // pred_fallthru
    _
  // Predicated region
  $region6: #{forward.2} parent=0 // pred_check
    _
  $region7: #{forward.2} parent=0 // pred_check_branch
    %19 = sbr.rel (0) target = $region9
  $region8: #{forward.2} parent=0 // pred_region
    _
  $region9: #{forward.2} parent=0 // pred_fallthru
    _
  // Predicated region
  $region10: #{forward.2} parent=0 // pred_check
    _
  $region11: #{forward.2} parent=0 // pred_check_branch
    %21 = sbr.rel (0) target = $region13
  $region12: #{forward.2} parent=0 // pred_region
    _
  $region13: #{forward.2} parent=0 // pred_fallthru
    _
  // Predicated region
  $region14: #{forward.2} parent=0 // pred_check
    _
  $region15: #{forward.2} parent=0 // pred_check_branch
    %23 = sbr.rel (0) target = $region17
  $region16: #{forward.2} parent=0 // pred_region
    _
  $region17: #{forward.2} parent=0 // pred_fallthru
    _
  // Predicated region
  $region18: #{forward.2} parent=0 // pred_check
    _
  $region19: #{forward.2} parent=0 // pred_check_branch
    %25 = sbr.rel (0) target = $region21
  $region20: #{forward.2} parent=0 // pred_region
    _
  $region21: #{forward.2} parent=0 // pred_fallthru
    _
  // Predicated region
  $region22: #{forward.2} parent=0 // pred_check
    _
  $region23: #{forward.2} parent=0 // pred_check_branch
    %27 = sbr.rel (0) target = $region25
  $region24: #{forward.2} parent=0 // pred_region
    _
  $region25: #{forward.2} parent=0 // pred_fallthru
    _
  // Predicated region
  $region26: #{forward.2} parent=0 // pred_check
    _
  $region27: #{forward.2} parent=0 // pred_check_branch
    %29 = sbr.rel (0) target = $region29
  $region28: #{forward.2} parent=0 // pred_region
    _
  $region29: #{forward.2} parent=0 // pred_fallthru
    _
  %v31 = vld [vmem:[%s0] sm:$0xf]
  %v32 = vld [vmem:[%s1] sm:$0xf]
  %v33 = vld [vmem:[%s1 + $0x4] sm:$0xf]
  %v34 = vld [vmem:[%s1 + $0x8] sm:$0xf]
  %v35 = vld [vmem:[%s1 + $0xc] sm:$0xf]
  %v36 = vld [vmem:[%s1 + $0x10] sm:$0xf]
  %v37 = vld [vmem:[%s1 + $0x14] sm:$0xf]
  %v38 = vld [vmem:[%s1 + $0x18] sm:$0xf]
  %v39 = vld [vmem:[%s1 + $0x1c] sm:$0xf]
  %v40 = vld [vmem:[%s1 + $0x20] sm:$0xf]
  %v41 = vld [vmem:[%s1 + $0x24] sm:$0xf]
  %v42 = vld [vmem:[%s1 + $0x28] sm:$0xf]
  %v43 = vld [vmem:[%s1 + $0x2c] sm:$0xf]
  %v44 = vld [vmem:[%s1 + $0x30] sm:$0xf]
  %v45 = vld [vmem:[%s1 + $0x34] sm:$0xf]
  %v46 = vld [vmem:[%s1 + $0x38] sm:$0xf]
  %v47 = vld [vmem:[%s1 + $0x3c] sm:$0xf]
  %v48 = vld [vmem:[%s2] sm:$0x1]
  %v50 = vlaneseq
  %v51 = vshrl.u32 %v50, 7
  %v52 = vsub.s32 0, %v51
  %v53 = vrot.slane %v48, %v52
  %v71 = vunpack.c.l.b16 %v32
  %v72 = vunpack.c.l.b16 %v33
  %v73 = vunpack.c.l.b16 %v34
  %v74 = vunpack.c.l.b16 %v35
  %v75 = vunpack.c.l.b16 %v36
  %v76 = vunpack.c.l.b16 %v37
  %v77 = vunpack.c.l.b16 %v38
  %v78 = vunpack.c.l.b16 %v39
  %v79 = vunpack.c.l.b16 %v40
  %v80 = vunpack.c.l.b16 %v41
  %v81 = vunpack.c.l.b16 %v42
  %v82 = vunpack.c.l.b16 %v43
  %v83 = vunpack.c.l.b16 %v44
  %v84 = vunpack.c.l.b16 %v45
  %v85 = vunpack.c.l.b16 %v46
  %v86 = vunpack.c.l.b16 %v47
  %v87 = vpack.c.b16 %v72, %v71
  %v88 = vpack.c.b16 %v74, %v73
  %v89 = vpack.c.b16 %v76, %v75
  %v90 = vpack.c.b16 %v78, %v77
  %v91 = vpack.c.b16 %v80, %v79
  %v92 = vpack.c.b16 %v82, %v81
  %v93 = vpack.c.b16 %v84, %v83
  %v94 = vpack.c.b16 %v86, %v85
  %103 = vmatprep.subr.bf16.mxu0 0
  %104 = vmatpush1.bf16.msra.mxu0 %v94
  %105 = vmatprep.subr.bf16.mxu0 0
  %106 = vmatpush1.bf16.msra.mxu0 %v93
  %107 = vmatprep.subr.bf16.mxu0 0
  %108 = vmatpush1.bf16.msra.mxu0 %v92
  %109 = vmatprep.subr.bf16.mxu0 0
  %110 = vmatpush1.bf16.msra.mxu0 %v91
  %111 = vmatprep.subr.bf16.mxu0 0
  %112 = vmatpush1.bf16.msra.mxu0 %v90
  %113 = vmatprep.subr.bf16.mxu0 0
  %114 = vmatpush1.bf16.msra.mxu0 %v89
  %115 = vmatprep.subr.bf16.mxu0 0
  %116 = vmatpush1.bf16.msra.mxu0 %v88
  %117 = vmatprep.subr.bf16.mxu0 0
  %118 = vmatpush1.bf16.msra.mxu0 %v87
  %119 = vmatprep.subr.bf16.mxu0 0
  %120 = vmatpush2.bf16.msra.mxu0 0
  %121 = vmatprep.subr.bf16.mxu0 0
  %122 = vmatpush2.bf16.msra.mxu0 0
  %123 = vmatprep.subr.bf16.mxu0 0
  %124 = vmatpush2.bf16.msra.mxu0 0
  %125 = vmatprep.subr.bf16.mxu0 0
  %126 = vmatpush2.bf16.msra.mxu0 0
  %127 = vmatprep.subr.bf16.mxu0 0
  %128 = vmatpush2.bf16.msra.mxu0 0
  %129 = vmatprep.subr.bf16.mxu0 0
  %130 = vmatpush2.bf16.msra.mxu0 0
  %131 = vmatprep.subr.bf16.mxu0 0
  %132 = vmatpush2.bf16.msra.mxu0 0
  %133 = vmatprep.subr.bf16.mxu0 0
  %134 = vmatpush2.bf16.msra.mxu0 0
  %135 = vmatprep.mubr.bf16.mxu0 0
  %136 = vmatmul.mubr.bf16.gmra.mxu0 %v31
  %v137 = vpop.f32.mrf.mxu0
  %v138 = vadd.f32 %v53, %v137
  %v139 = vpop.f32.mrf.mxu0
  %v140 = vpop.f32.mrf.mxu0
  %v141 = vpop.f32.mrf.mxu0
  %142 = vdwg.mxu0
  %v143 = vtanh.pop %v138
  %v144 = vpack.c.bf16 %v143, %v143
  %v145 = vld [vmem:[%s3] sm:$0xf]
  %v146 = vld [vmem:[%s3 + $0x4] sm:$0xf]
  %v147 = vld [vmem:[%s3 + $0x8] sm:$0xf]
  %v148 = vld [vmem:[%s3 + $0xc] sm:$0xf]
  %v149 = vld [vmem:[%s3 + $0x10] sm:$0xf]
  %v150 = vld [vmem:[%s3 + $0x14] sm:$0xf]
  %v151 = vld [vmem:[%s3 + $0x18] sm:$0xf]
  %v152 = vld [vmem:[%s3 + $0x1c] sm:$0xf]
  %v153 = vld [vmem:[%s3 + $0x20] sm:$0xf]
  %v154 = vld [vmem:[%s3 + $0x24] sm:$0xf]
  %v155 = vld [vmem:[%s3 + $0x28] sm:$0xf]
  %v156 = vld [vmem:[%s3 + $0x2c] sm:$0xf]
  %v157 = vld [vmem:[%s3 + $0x30] sm:$0xf]
  %v158 = vld [vmem:[%s3 + $0x34] sm:$0xf]
  %v159 = vld [vmem:[%s3 + $0x38] sm:$0xf]
  %v160 = vld [vmem:[%s3 + $0x3c] sm:$0xf]
  %v161 = vld [vmem:[%s4] sm:$0x1]
  %v163 = vlaneseq
  %v164 = vshrl.u32 %v163, 7
  %v165 = vsub.s32 0, %v164
  %v166 = vrot.slane %v161, %v165
  %v184 = vunpack.c.l.b16 %v145
  %v185 = vunpack.c.l.b16 %v146
  %v186 = vunpack.c.l.b16 %v147
  %v187 = vunpack.c.l.b16 %v148
  %v188 = vunpack.c.l.b16 %v149
  %v189 = vunpack.c.l.b16 %v150
  %v190 = vunpack.c.l.b16 %v151
  %v191 = vunpack.c.l.b16 %v152
  %v192 = vunpack.c.l.b16 %v153
  %v193 = vunpack.c.l.b16 %v154
  %v194 = vunpack.c.l.b16 %v155
  %v195 = vunpack.c.l.b16 %v156
  %v196 = vunpack.c.l.b16 %v157
  %v197 = vunpack.c.l.b16 %v158
  %v198 = vunpack.c.l.b16 %v159
  %v199 = vunpack.c.l.b16 %v160
  %v200 = vpack.c.b16 %v185, %v184
  %v201 = vpack.c.b16 %v187, %v186
  %v202 = vpack.c.b16 %v189, %v188
  %v203 = vpack.c.b16 %v191, %v190
  %v204 = vpack.c.b16 %v193, %v192
  %v205 = vpack.c.b16 %v195, %v194
  %v206 = vpack.c.b16 %v197, %v196
  %v207 = vpack.c.b16 %v199, %v198
  %216 = vmatprep.subr.bf16.mxu0 0
  %217 = vmatpush1.bf16.msra.mxu0 %v207
  %218 = vmatprep.subr.bf16.mxu0 0
  %219 = vmatpush1.bf16.msra.mxu0 %v206
  %220 = vmatprep.subr.bf16.mxu0 0
  %221 = vmatpush1.bf16.msra.mxu0 %v205
  %222 = vmatprep.subr.bf16.mxu0 0
  %223 = vmatpush1.bf16.msra.mxu0 %v204
  %224 = vmatprep.subr.bf16.mxu0 0
  %225 = vmatpush1.bf16.msra.mxu0 %v203
  %226 = vmatprep.subr.bf16.mxu0 0
  %227 = vmatpush1.bf16.msra.mxu0 %v202
  %228 = vmatprep.subr.bf16.mxu0 0
  %229 = vmatpush1.bf16.msra.mxu0 %v201
  %230 = vmatprep.subr.bf16.mxu0 0
  %231 = vmatpush1.bf16.msra.mxu0 %v200
  %232 = vmatprep.subr.bf16.mxu0 0
  %233 = vmatpush2.bf16.msra.mxu0 0
  %234 = vmatprep.subr.bf16.mxu0 0
  %235 = vmatpush2.bf16.msra.mxu0 0
  %236 = vmatprep.subr.bf16.mxu0 0
  %237 = vmatpush2.bf16.msra.mxu0 0
  %238 = vmatprep.subr.bf16.mxu0 0
  %239 = vmatpush2.bf16.msra.mxu0 0
  %240 = vmatprep.subr.bf16.mxu0 0
  %241 = vmatpush2.bf16.msra.mxu0 0
  %242 = vmatprep.subr.bf16.mxu0 0
  %243 = vmatpush2.bf16.msra.mxu0 0
  %244 = vmatprep.subr.bf16.mxu0 0
  %245 = vmatpush2.bf16.msra.mxu0 0
  %246 = vmatprep.subr.bf16.mxu0 0
  %247 = vmatpush2.bf16.msra.mxu0 0
  %248 = vmatprep.mubr.bf16.mxu0 0
  %249 = vmatmul.mubr.bf16.gmra.mxu0 %v144
  %v250 = vpop.f32.mrf.mxu0
  %v251 = vadd.f32 %v166, %v250
  %v252 = vpop.f32.mrf.mxu0
  %v253 = vpop.f32.mrf.mxu0
  %v254 = vpop.f32.mrf.mxu0
  %255 = vdwg.mxu0
  %v256 = vmul.f32 %v251, %v251
  %257 = vadd.xlane.f32.xlu0 %v256
  %v258 = vpop.xlane.xlu0 %257
  %v259 = vadd.f32 %v258, 1e-12
  %v260 = vrsqrt.pop %v259
  %v261 = vmul.f32 %v251, %v260
  %262 = vst [vmem:[%s7] sm:$0xff] %v261
  %v263 = vld [vmem:[%s5] sm:$0x1]
  %v265 = vlaneseq
  %v266 = vshrl.u32 %v265, 7
  %v267 = vsub.s32 0, %v266
  %v268 = vrot.slane %v263, %v267
  %v270 = vmul.f32 %v143, %v268
  %271 = vadd.xlane.f32.xlu0 %v270
  %v272 = vpop.xlane.xlu0 %271
  %v273 = vld [vmem:[#allocation2] sm:$0x1]
  %v275 = vlaneseq
  %v276 = vshrl.u32 %v275, 7
  %v277 = vsub.s32 0, %v276
  %v278 = vrot.slane %v273, %v277
  %v280 = vadd.f32 %v272, %v278
  %v281 = vmin.f32 %v280, 80.0
  %v282 = vmul.f32 %v281, 1.442695
  %v283 = vpow.pop %v282
  %285 = vset.pattern.permute.xlu0 0
  %286 = vperm.xlu0 %285, %v283
  %v287 = vpop.permute.xlu0 %286
  %289 = vst [vmem:[%s8] sm:$0xff] %v287
  // Predicated region
  $region30: #{forward.2} parent=0 // pred_check
    _
  $region31: #{forward.2} parent=0 // pred_check_branch
    %291 = sbr.rel (0) target = $region33
  $region32: #{forward.2} parent=0 // pred_region
    _
  $region33: #{forward.2} parent=0 // pred_fallthru
    _
  // Predicated region
  $region34: #{forward.2} parent=0 // pred_check
    _
  $region35: #{forward.2} parent=0 // pred_check_branch
    %293 = sbr.rel (0) target = $region37
  $region36: #{forward.2} parent=0 // pred_region
    _
  $region37: #{forward.2} parent=0 // pred_fallthru
    _
  // Predicated region
  $region38: #{forward.2} parent=0 // pred_check
    _
  $region39: #{forward.2} parent=0 // pred_check_branch
    %295 = sbr.rel (0) target = $region41
  $region40: #{forward.2} parent=0 // pred_region
    _
  $region41: #{forward.2} parent=0 // pred_fallthru
    _
  // Predicated region
  $region42: #{forward.2} parent=0 // pred_check
    _
  $region43: #{forward.2} parent=0 // pred_check_branch
    %297 = sbr.rel (0) target = $region45
  $region44: #{forward.2} parent=0 // pred_region
    _
  $region45: #{forward.2} parent=0 // pred_fallthru
    _

// kernel: forward.3
$region0: #{forward.3}
  #allocation0 [shape = 'u32[]', space=smem, size = 0x4, offset = 0x4, fixed_abs, tag = 'smem constant byte address 0x4 - core index']
  #allocation1 [shape = 'u32[144,128]{1,0:T(1,128)}', space=vmem, size = 0x12000, scoped, tag = 'internal scratch']
  %s0 = inlined_call_operand.vmem [shape: bf16[32,128], index: 0, kind: input, shape index: {}]
  %s1 = inlined_call_operand.vmem [shape: s32[32,1], index: 1, kind: input, shape index: {}]
  %s2 = inlined_call_operand.vmem [shape: bf16[128,128], index: 2, kind: input, shape index: {}]
  %s3 = inlined_call_operand.vmem [shape: f32[1,128], index: 3, kind: input, shape index: {}]
  %s4 = inlined_call_operand.vmem [shape: bf16[128,128], index: 4, kind: input, shape index: {}]
  %s5 = inlined_call_operand.vmem [shape: f32[1,128], index: 5, kind: input, shape index: {}]
  %s6 = inlined_call_operand.vmem [shape: bf16[128,256], index: 6, kind: input, shape index: {}]
  %s7 = inlined_call_operand.vmem [shape: f32[1,256], index: 7, kind: input, shape index: {}]
  %s8 = inlined_call_operand.vmem [shape: bf16[32,256], index: 8, kind: output, shape index: {0}]
  %s9 = inlined_call_operand.hbm [shape: f32[1,128], index: 9, kind: output, shape index: {1}]
  %10 = xla_tuple %s8, %s9
  %s11 = sld [smem:[#allocation0]]
  $region50: #{forward.3} parent=0
    _
  %s13 = ssub.s32 1, %s11
  %s14 = scalar_select 0, %s13, %s11
  $region1: #{forward.3} parent=0
    #allocation2 [shape = 'u8[512]{0}', space=vmem, size = 0x400, scoped, tag = 'output window, operand 1, single buffered']
    #allocation3 [shape = 's32[1]{0}', space=sflag, size = 0x4, scoped, tag = 'scoped memory for forward.3']
    %15 = vsyncpa [#allocation3], 0
    // Predicated region
    $region2: #{forward.3} parent=1 // pred_check
      _
    $region3: #{forward.3} parent=1 // pred_check_branch
      %17 = sbr.rel (0) target = $region5
    $region4: #{forward.3} parent=1 // pred_region
      _
    $region5: #{forward.3} parent=1 // pred_fallthru
      _
    // Predicated region
    $region6: #{forward.3} parent=1 // pred_check
      _
    $region7: #{forward.3} parent=1 // pred_check_branch
      %19 = sbr.rel (0) target = $region9
    $region8: #{forward.3} parent=1 // pred_region
      _
    $region9: #{forward.3} parent=1 // pred_fallthru
      _
    // Predicated region
    $region10: #{forward.3} parent=1 // pred_check
      _
    $region11: #{forward.3} parent=1 // pred_check_branch
      %21 = sbr.rel (0) target = $region13
    $region12: #{forward.3} parent=1 // pred_region
      _
    $region13: #{forward.3} parent=1 // pred_fallthru
      _
    // Predicated region
    $region14: #{forward.3} parent=1 // pred_check
      _
    $region15: #{forward.3} parent=1 // pred_check_branch
      %23 = sbr.rel (0) target = $region17
    $region16: #{forward.3} parent=1 // pred_region
      _
    $region17: #{forward.3} parent=1 // pred_fallthru
      _
    // Predicated region
    $region18: #{forward.3} parent=1 // pred_check
      _
    $region19: #{forward.3} parent=1 // pred_check_branch
      %25 = sbr.rel (0) target = $region21
    $region20: #{forward.3} parent=1 // pred_region
      _
    $region21: #{forward.3} parent=1 // pred_fallthru
      _
    // Predicated region
    $region22: #{forward.3} parent=1 // pred_check
      _
    $region23: #{forward.3} parent=1 // pred_check_branch
      %27 = sbr.rel (0) target = $region25
    $region24: #{forward.3} parent=1 // pred_region
      _
    $region25: #{forward.3} parent=1 // pred_fallthru
      _
    // Predicated region
    $region26: #{forward.3} parent=1 // pred_check
      _
    $region27: #{forward.3} parent=1 // pred_check_branch
      %29 = sbr.rel (0) target = $region29
    $region28: #{forward.3} parent=1 // pred_region
      _
    $region29: #{forward.3} parent=1 // pred_fallthru
      _
    // Predicated region
    $region30: #{forward.3} parent=1 // pred_check
      _
    $region31: #{forward.3} parent=1 // pred_check_branch
      %31 = sbr.rel (0) target = $region33
    $region32: #{forward.3} parent=1 // pred_region
      _
    $region33: #{forward.3} parent=1 // pred_fallthru
      _
    %v33 = vld [vmem:[%s0] sm:$0xf]
    %v34 = vld [vmem:[%s0 + $0x4] sm:$0xf]
    %v35 = vld [vmem:[%s0 + $0x8] sm:$0xf]
    %v36 = vld [vmem:[%s0 + $0xc] sm:$0xf]
    %v37 = vld [vmem:[%s2] sm:$0xf]
    %v38 = vld [vmem:[%s2 + $0x4] sm:$0xf]
    %v39 = vld [vmem:[%s2 + $0x8] sm:$0xf]
    %v40 = vld [vmem:[%s2 + $0xc] sm:$0xf]
    %v41 = vld [vmem:[%s2 + $0x10] sm:$0xf]
    %v42 = vld [vmem:[%s2 + $0x14] sm:$0xf]
    %v43 = vld [vmem:[%s2 + $0x18] sm:$0xf]
    %v44 = vld [vmem:[%s2 + $0x1c] sm:$0xf]
    %v45 = vld [vmem:[%s2 + $0x20] sm:$0xf]
    %v46 = vld [vmem:[%s2 + $0x24] sm:$0xf]
    %v47 = vld [vmem:[%s2 + $0x28] sm:$0xf]
    %v48 = vld [vmem:[%s2 + $0x2c] sm:$0xf]
    %v49 = vld [vmem:[%s2 + $0x30] sm:$0xf]
    %v50 = vld [vmem:[%s2 + $0x34] sm:$0xf]
    %v51 = vld [vmem:[%s2 + $0x38] sm:$0xf]
    %v52 = vld [vmem:[%s2 + $0x3c] sm:$0xf]
    %v53 = vld [vmem:[%s3] sm:$0x1]
    %v55 = vlaneseq
    %v56 = vshrl.u32 %v55, 7
    %v57 = vsub.s32 0, %v56
    %v58 = vrot.slane %v53, %v57
    %v62 = vunpack.c.l.b16 %v33
    %v63 = vunpack.c.l.b16 %v34
    %v64 = vpack.c.b16 %v63, %v62
    %v82 = vunpack.c.l.b16 %v37
    %v83 = vunpack.c.l.b16 %v38
    %v84 = vunpack.c.l.b16 %v39
    %v85 = vunpack.c.l.b16 %v40
    %v86 = vunpack.c.l.b16 %v41
    %v87 = vunpack.c.l.b16 %v42
    %v88 = vunpack.c.l.b16 %v43
    %v89 = vunpack.c.l.b16 %v44
    %v90 = vunpack.c.l.b16 %v45
    %v91 = vunpack.c.l.b16 %v46
    %v92 = vunpack.c.l.b16 %v47
    %v93 = vunpack.c.l.b16 %v48
    %v94 = vunpack.c.l.b16 %v49
    %v95 = vunpack.c.l.b16 %v50
    %v96 = vunpack.c.l.b16 %v51
    %v97 = vunpack.c.l.b16 %v52
    %v98 = vpack.c.b16 %v83, %v82
    %v99 = vpack.c.b16 %v85, %v84
    %v100 = vpack.c.b16 %v87, %v86
    %v101 = vpack.c.b16 %v89, %v88
    %v102 = vpack.c.b16 %v91, %v90
    %v103 = vpack.c.b16 %v93, %v92
    %v104 = vpack.c.b16 %v95, %v94
    %v105 = vpack.c.b16 %v97, %v96
    %114 = vmatprep.subr.bf16.mxu0 0
    %115 = vmatpush1.bf16.msra.mxu0 %v105
    %116 = vmatprep.subr.bf16.mxu0 0
    %117 = vmatpush1.bf16.msra.mxu0 %v104
    %118 = vmatprep.subr.bf16.mxu0 0
    %119 = vmatpush1.bf16.msra.mxu0 %v103
    %120 = vmatprep.subr.bf16.mxu0 0
    %121 = vmatpush1.bf16.msra.mxu0 %v102
    %122 = vmatprep.subr.bf16.mxu0 0
    %123 = vmatpush1.bf16.msra.mxu0 %v101
    %124 = vmatprep.subr.bf16.mxu0 0
    %125 = vmatpush1.bf16.msra.mxu0 %v100
    %126 = vmatprep.subr.bf16.mxu0 0
    %127 = vmatpush1.bf16.msra.mxu0 %v99
    %128 = vmatprep.subr.bf16.mxu0 0
    %129 = vmatpush1.bf16.msra.mxu0 %v98
    %130 = vmatprep.subr.bf16.mxu0 0
    %131 = vmatpush2.bf16.msra.mxu0 0
    %132 = vmatprep.subr.bf16.mxu0 0
    %133 = vmatpush2.bf16.msra.mxu0 0
    %134 = vmatprep.subr.bf16.mxu0 0
    %135 = vmatpush2.bf16.msra.mxu0 0
    %136 = vmatprep.subr.bf16.mxu0 0
    %137 = vmatpush2.bf16.msra.mxu0 0
    %138 = vmatprep.subr.bf16.mxu0 0
    %139 = vmatpush2.bf16.msra.mxu0 0
    %140 = vmatprep.subr.bf16.mxu0 0
    %141 = vmatpush2.bf16.msra.mxu0 0
    %142 = vmatprep.subr.bf16.mxu0 0
    %143 = vmatpush2.bf16.msra.mxu0 0
    %144 = vmatprep.subr.bf16.mxu0 0
    %145 = vmatpush2.bf16.msra.mxu0 0
    %146 = vmatprep.mubr.bf16.mxu0 0
    %147 = vmatmul.mubr.bf16.gmra.mxu0 %v64
    %v148 = vpop.f32.mrf.mxu0
    %v149 = vadd.f32 %v58, %v148
    %v150 = vpop.f32.mrf.mxu0
    %v151 = vpop.f32.mrf.mxu0
    %v152 = vadd.f32 %v58, %v151
    %v153 = vpop.f32.mrf.mxu0
    %154 = vdwg.mxu0
    %v155 = vpack.c.bf16 %v152, %v149
    %v158 = vunpack.c.l.b16 %v35
    %v159 = vunpack.c.l.b16 %v36
    %v160 = vpack.c.b16 %v159, %v158
    %v162 = vld [vmem:[%s4] sm:$0xf]
    %v163 = vld [vmem:[%s4 + $0x4] sm:$0xf]
    %v164 = vld [vmem:[%s4 + $0x8] sm:$0xf]
    %v165 = vld [vmem:[%s4 + $0xc] sm:$0xf]
    %v166 = vld [vmem:[%s4 + $0x10] sm:$0xf]
    %v167 = vld [vmem:[%s4 + $0x14] sm:$0xf]
    %v168 = vld [vmem:[%s4 + $0x18] sm:$0xf]
    %v169 = vld [vmem:[%s4 + $0x1c] sm:$0xf]
    %v170 = vld [vmem:[%s4 + $0x20] sm:$0xf]
    %v171 = vld [vmem:[%s4 + $0x24] sm:$0xf]
    %v172 = vld [vmem:[%s4 + $0x28] sm:$0xf]
    %v173 = vld [vmem:[%s4 + $0x2c] sm:$0xf]
    %v174 = vld [vmem:[%s4 + $0x30] sm:$0xf]
    %v175 = vld [vmem:[%s4 + $0x34] sm:$0xf]
    %v176 = vld [vmem:[%s4 + $0x38] sm:$0xf]
    %v177 = vld [vmem:[%s4 + $0x3c] sm:$0xf]
    %v178 = vld [vmem:[%s5] sm:$0x1]
    %v180 = vlaneseq
    %v181 = vshrl.u32 %v180, 7
    %v182 = vsub.s32 0, %v181
    %v183 = vrot.slane %v178, %v182
    %v201 = vunpack.c.l.b16 %v162
    %v202 = vunpack.c.l.b16 %v163
    %v203 = vunpack.c.l.b16 %v164
    %v204 = vunpack.c.l.b16 %v165
    %v205 = vunpack.c.l.b16 %v166
    %v206 = vunpack.c.l.b16 %v167
    %v207 = vunpack.c.l.b16 %v168
    %v208 = vunpack.c.l.b16 %v169
    %v209 = vunpack.c.l.b16 %v170
    %v210 = vunpack.c.l.b16 %v171
    %v211 = vunpack.c.l.b16 %v172
    %v212 = vunpack.c.l.b16 %v173
    %v213 = vunpack.c.l.b16 %v174
    %v214 = vunpack.c.l.b16 %v175
    %v215 = vunpack.c.l.b16 %v176
    %v216 = vunpack.c.l.b16 %v177
    %v217 = vpack.c.b16 %v202, %v201
    %v218 = vpack.c.b16 %v204, %v203
    %v219 = vpack.c.b16 %v206, %v205
    %v220 = vpack.c.b16 %v208, %v207
    %v221 = vpack.c.b16 %v210, %v209
    %v222 = vpack.c.b16 %v212, %v211
    %v223 = vpack.c.b16 %v214, %v213
    %v224 = vpack.c.b16 %v216, %v215
    %233 = vmatprep.subr.bf16.mxu0 0
    %234 = vmatpush1.bf16.msra.mxu0 %v224
    %235 = vmatprep.subr.bf16.mxu0 0
    %236 = vmatpush1.bf16.msra.mxu0 %v223
    %237 = vmatprep.subr.bf16.mxu0 0
    %238 = vmatpush1.bf16.msra.mxu0 %v222
    %239 = vmatprep.subr.bf16.mxu0 0
    %240 = vmatpush1.bf16.msra.mxu0 %v221
    %241 = vmatprep.subr.bf16.mxu0 0
    %242 = vmatpush1.bf16.msra.mxu0 %v220
    %243 = vmatprep.subr.bf16.mxu0 0
    %244 = vmatpush1.bf16.msra.mxu0 %v219
    %245 = vmatprep.subr.bf16.mxu0 0
    %246 = vmatpush1.bf16.msra.mxu0 %v218
    %247 = vmatprep.subr.bf16.mxu0 0
    %248 = vmatpush1.bf16.msra.mxu0 %v217
    %249 = vmatprep.subr.bf16.mxu0 0
    %250 = vmatpush2.bf16.msra.mxu0 0
    %251 = vmatprep.subr.bf16.mxu0 0
    %252 = vmatpush2.bf16.msra.mxu0 0
    %253 = vmatprep.subr.bf16.mxu0 0
    %254 = vmatpush2.bf16.msra.mxu0 0
    %255 = vmatprep.subr.bf16.mxu0 0
    %256 = vmatpush2.bf16.msra.mxu0 0
    %257 = vmatprep.subr.bf16.mxu0 0
    %258 = vmatpush2.bf16.msra.mxu0 0
    %259 = vmatprep.subr.bf16.mxu0 0
    %260 = vmatpush2.bf16.msra.mxu0 0
    %261 = vmatprep.subr.bf16.mxu0 0
    %262 = vmatpush2.bf16.msra.mxu0 0
    %263 = vmatprep.subr.bf16.mxu0 0
    %264 = vmatpush2.bf16.msra.mxu0 0
    %265 = vmatprep.mubr.bf16.mxu0 0
    %266 = vmatmul.mubr.bf16.gmra.mxu0 %v155
    %v267 = vpop.f32.mrf.mxu0
    %v268 = vadd.f32 %v183, %v267
    %v269 = vpop.f32.mrf.mxu0
    %v270 = vpop.f32.mrf.mxu0
    %v271 = vadd.f32 %v183, %v270
    %v272 = vpop.f32.mrf.mxu0
    %273 = vmatprep.mubr.bf16.mxu0 0
    %274 = vmatmul.mubr.bf16.gmra.mxu0 %v160
    %v275 = vpop.f32.mrf.mxu0
    %v276 = vadd.f32 %v183, %v275
    %v277 = vpop.f32.mrf.mxu0
    %v278 = vpop.f32.mrf.mxu0
    %v279 = vadd.f32 %v183, %v278
    %v280 = vpop.f32.mrf.mxu0
    %281 = vdwg.mxu0
    %v282 = vtanh.pop %v268
    %v283 = vtanh.pop %v271
    %v284 = vtanh.pop %v276
    %v285 = vtanh.pop %v279
    %v286 = vpack.c.bf16 %v283, %v282
    %v287 = vpack.c.bf16 %v285, %v284
    %v288 = vld [vmem:[%s6] sm:$0xff]
    %v289 = vld [vmem:[%s6 + $0x8] sm:$0xff]
    %v290 = vld [vmem:[%s6 + $0x10] sm:$0xff]
    %v291 = vld [vmem:[%s6 + $0x18] sm:$0xff]
    %v292 = vld [vmem:[%s6 + $0x20] sm:$0xff]
    %v293 = vld [vmem:[%s6 + $0x28] sm:$0xff]
    %v294 = vld [vmem:[%s6 + $0x30] sm:$0xff]
    %v295 = vld [vmem:[%s6 + $0x38] sm:$0xff]
    %v296 = vld [vmem:[%s6 + $0x40] sm:$0xff]
    %v297 = vld [vmem:[%s6 + $0x48] sm:$0xff]
    %v298 = vld [vmem:[%s6 + $0x50] sm:$0xff]
    %v299 = vld [vmem:[%s6 + $0x58] sm:$0xff]
    %v300 = vld [vmem:[%s6 + $0x60] sm:$0xff]
    %v301 = vld [vmem:[%s6 + $0x68] sm:$0xff]
    %v302 = vld [vmem:[%s6 + $0x70] sm:$0xff]
    %v303 = vld [vmem:[%s6 + $0x78] sm:$0xff]
    %v304 = vld [vmem:[%s7] sm:$0x3]
    %v306 = vlaneseq
    %v307 = vshrl.u32 %v306, 7
    %v308 = vsub.s32 0, %v307
    %v309 = vrot.slane %v304, %v308
    %v310 = vlaneseq
    %v311 = vshrl.u32 %v310, 7
    %v312 = vsub.s32 1, %v311
    %v313 = vrot.slane %v304, %v312
    %v332 = vunpack.c.l.b16 %v288
    %v333 = vunpack.c.h.b16 %v288
    %v334 = vunpack.c.l.b16 %v289
    %v335 = vunpack.c.h.b16 %v289
    %v336 = vunpack.c.l.b16 %v290
    %v337 = vunpack.c.h.b16 %v290
    %v338 = vunpack.c.l.b16 %v291
    %v339 = vunpack.c.h.b16 %v291
    %v340 = vunpack.c.l.b16 %v292
    %v341 = vunpack.c.h.b16 %v292
    %v342 = vunpack.c.l.b16 %v293
    %v343 = vunpack.c.h.b16 %v293
    %v344 = vunpack.c.l.b16 %v294
    %v345 = vunpack.c.h.b16 %v294
    %v346 = vunpack.c.l.b16 %v295
    %v347 = vunpack.c.h.b16 %v295
    %v348 = vunpack.c.l.b16 %v296
    %v349 = vunpack.c.h.b16 %v296
    %v350 = vunpack.c.l.b16 %v297
    %v351 = vunpack.c.h.b16 %v297
    %v352 = vunpack.c.l.b16 %v298
    %v353 = vunpack.c.h.b16 %v298
    %v354 = vunpack.c.l.b16 %v299
    %v355 = vunpack.c.h.b16 %v299
    %v356 = vunpack.c.l.b16 %v300
    %v357 = vunpack.c.h.b16 %v300
    %v358 = vunpack.c.l.b16 %v301
    %v359 = vunpack.c.h.b16 %v301
    %v360 = vunpack.c.l.b16 %v302
    %v361 = vunpack.c.h.b16 %v302
    %v362 = vunpack.c.l.b16 %v303
    %v363 = vunpack.c.h.b16 %v303
    %v364 = vpack.c.b16 %v334, %v332
    %v365 = vpack.c.b16 %v335, %v333
    %v366 = vpack.c.b16 %v338, %v336
    %v367 = vpack.c.b16 %v339, %v337
    %v368 = vpack.c.b16 %v342, %v340
    %v369 = vpack.c.b16 %v343, %v341
    %v370 = vpack.c.b16 %v346, %v344
    %v371 = vpack.c.b16 %v347, %v345
    %v372 = vpack.c.b16 %v350, %v348
    %v373 = vpack.c.b16 %v351, %v349
    %v374 = vpack.c.b16 %v354, %v352
    %v375 = vpack.c.b16 %v355, %v353
    %v376 = vpack.c.b16 %v358, %v356
    %v377 = vpack.c.b16 %v359, %v357
    %v378 = vpack.c.b16 %v362, %v360
    %v379 = vpack.c.b16 %v363, %v361
    %396 = vmatprep.subr.bf16.mxu0 %v379
    %397 = vmatpush1.bf16.msra.mxu0 %v378
    %398 = vmatprep.subr.bf16.mxu0 %v377
    %399 = vmatpush1.bf16.msra.mxu0 %v376
    %400 = vmatprep.subr.bf16.mxu0 %v375
    %401 = vmatpush1.bf16.msra.mxu0 %v374
    %402 = vmatprep.subr.bf16.mxu0 %v373
    %403 = vmatpush1.bf16.msra.mxu0 %v372
    %404 = vmatprep.subr.bf16.mxu0 %v371
    %405 = vmatpush1.bf16.msra.mxu0 %v370
    %406 = vmatprep.subr.bf16.mxu0 %v369
    %407 = vmatpush1.bf16.msra.mxu0 %v368
    %408 = vmatprep.subr.bf16.mxu0 %v367
    %409 = vmatpush1.bf16.msra.mxu0 %v366
    %410 = vmatprep.subr.bf16.mxu0 %v365
    %411 = vmatpush1.bf16.msra.mxu0 %v364
    %412 = vmatprep.subr.bf16.mxu0 0
    %413 = vmatpush2.bf16.msra.mxu0 0
    %414 = vmatprep.subr.bf16.mxu0 0
    %415 = vmatpush2.bf16.msra.mxu0 0
    %416 = vmatprep.subr.bf16.mxu0 0
    %417 = vmatpush2.bf16.msra.mxu0 0
    %418 = vmatprep.subr.bf16.mxu0 0
    %419 = vmatpush2.bf16.msra.mxu0 0
    %420 = vmatprep.subr.bf16.mxu0 0
    %421 = vmatpush2.bf16.msra.mxu0 0
    %422 = vmatprep.subr.bf16.mxu0 0
    %423 = vmatpush2.bf16.msra.mxu0 0
    %424 = vmatprep.subr.bf16.mxu0 0
    %425 = vmatpush2.bf16.msra.mxu0 0
    %426 = vmatprep.subr.bf16.mxu0 0
    %427 = vmatpush2.bf16.msra.mxu0 0
    %428 = vmatprep.mubr.bf16.mxu0 0
    %429 = vmatmul.mubr.bf16.gmra.mxu0 %v286
    %v430 = vpop.f32.mrf.mxu0
    %v431 = vadd.f32 %v309, %v430
    %v432 = vpop.f32.mrf.mxu0
    %v433 = vadd.f32 %v313, %v432
    %v434 = vpop.f32.mrf.mxu0
    %v435 = vadd.f32 %v309, %v434
    %v436 = vpop.f32.mrf.mxu0
    %v437 = vadd.f32 %v313, %v436
    %438 = vmatprep.mubr.bf16.mxu0 0
    %439 = vmatmul.mubr.bf16.gmra.mxu0 %v287
    %v440 = vpop.f32.mrf.mxu0
    %v441 = vadd.f32 %v309, %v440
    %v442 = vpop.f32.mrf.mxu0
    %v443 = vadd.f32 %v313, %v442
    %v444 = vpop.f32.mrf.mxu0
    %v445 = vadd.f32 %v309, %v444
    %v446 = vpop.f32.mrf.mxu0
    %v447 = vadd.f32 %v313, %v446
    %448 = vdwg.mxu0
    %v449 = vpack.c.bf16 %v435, %v431
    %v450 = vpack.c.bf16 %v437, %v433
    %v451 = vpack.c.bf16 %v445, %v441
    %v452 = vpack.c.bf16 %v447, %v443
    %v457 = vunpack.c.l.b16 %v449
    %v458 = vunpack.c.l.b16 %v450
    %v459 = vunpack.c.h.b16 %v449
    %v460 = vunpack.c.h.b16 %v450
    %v461 = vunpack.c.l.b16 %v451
    %v462 = vunpack.c.l.b16 %v452
    %v463 = vunpack.c.h.b16 %v451
    %v464 = vunpack.c.h.b16 %v452
    %v465 = vpack.c.b16 %v458, %v457
    %v466 = vpack.c.b16 %v460, %v459
    %v467 = vpack.c.b16 %v462, %v461
    %v468 = vpack.c.b16 %v464, %v463
    %473 = vst [vmem:[%s8] sm:$0xff] %v465
    %474 = vst [vmem:[%s8 + $0x8] sm:$0xff] %v466
    %475 = vst [vmem:[%s8 + $0x10] sm:$0xff] %v467
    %476 = vst [vmem:[%s8 + $0x18] sm:$0xff] %v468
    %v477 = vld [vmem:[%s1] sm:$0xff]
    %v478 = vld [vmem:[%s1 + $0x8] sm:$0xff]
    %v479 = vld [vmem:[%s1 + $0x10] sm:$0xff]
    %v480 = vld [vmem:[%s1 + $0x18] sm:$0xff]
    %v481 = vmax.f32 %v431, %v433
    %482 = vmax.xlane.f32.xlu0 %v481
    %v483 = vpop.xlane.xlu0 %482
    %v484 = vmax.f32 %v435, %v437
    %485 = vmax.xlane.f32.xlu0 %v484
    %v486 = vpop.xlane.xlu0 %485
    %v487 = vmax.f32 %v441, %v443
    %488 = vmax.xlane.f32.xlu0 %v487
    %v489 = vpop.xlane.xlu0 %488
    %v490 = vmax.f32 %v445, %v447
    %491 = vmax.xlane.f32.xlu0 %v490
    %v492 = vpop.xlane.xlu0 %491
    %v493 = vsub.f32 %v431, %v483
    %v494 = vsub.f32 %v433, %v483
    %v495 = vsub.f32 %v435, %v486
    %v496 = vsub.f32 %v437, %v486
    %v497 = vsub.f32 %v441, %v489
    %v498 = vsub.f32 %v443, %v489
    %v499 = vsub.f32 %v445, %v492
    %v500 = vsub.f32 %v447, %v492
    %v501 = vmul.f32 %v493, 1.442695
    %v502 = vpow.pop %v501
    %v503 = vmul.f32 %v494, 1.442695
    %v504 = vpow.pop %v503
    %v505 = vmul.f32 %v495, 1.442695
    %v506 = vpow.pop %v505
    %v507 = vmul.f32 %v496, 1.442695
    %v508 = vpow.pop %v507
    %v509 = vmul.f32 %v497, 1.442695
    %v510 = vpow.pop %v509
    %v511 = vmul.f32 %v498, 1.442695
    %v512 = vpow.pop %v511
    %v513 = vmul.f32 %v499, 1.442695
    %v514 = vpow.pop %v513
    %v515 = vmul.f32 %v500, 1.442695
    %v516 = vpow.pop %v515
    %v517 = vadd.f32 %v502, %v504
    %518 = vadd.xlane.f32.xlu0 %v517
    %v519 = vpop.xlane.xlu0 %518
    %v520 = vadd.f32 %v506, %v508
    %521 = vadd.xlane.f32.xlu0 %v520
    %v522 = vpop.xlane.xlu0 %521
    %v523 = vadd.f32 %v510, %v512
    %524 = vadd.xlane.f32.xlu0 %v523
    %v525 = vpop.xlane.xlu0 %524
    %v526 = vadd.f32 %v514, %v516
    %527 = vadd.xlane.f32.xlu0 %v526
    %v528 = vpop.xlane.xlu0 %527
    %v529 = vlog2.pop %v519
    %v530 = vmul.f32 %v529, 0.6931472
    %v531 = vlog2.pop %v522
    %v532 = vmul.f32 %v531, 0.6931472
    %v533 = vlog2.pop %v525
    %v534 = vmul.f32 %v533, 0.6931472
    %v535 = vlog2.pop %v528
    %v536 = vmul.f32 %v535, 0.6931472
    %v537 = vadd.f32 %v530, %v483
    %v538 = vadd.f32 %v532, %v486
    %v539 = vadd.f32 %v534, %v489
    %v540 = vadd.f32 %v536, %v492
    %v541 = vlaneseq
    %v542 = vand.u32 %v541, 127
    %v543 = vadd.s32 %v542, 128
    %544 = vset.pattern.permute.xlu0 0
    %545 = vperm.xlu0 %544, %v477
    %v546 = vpop.permute.xlu0 %545
    %547 = vset.pattern.permute.xlu0 0
    %548 = vperm.xlu0 %547, %v478
    %v549 = vpop.permute.xlu0 %548
    %550 = vset.pattern.permute.xlu0 0
    %551 = vperm.xlu0 %550, %v479
    %v552 = vpop.permute.xlu0 %551
    %553 = vset.pattern.permute.xlu0 0
    %554 = vperm.xlu0 %553, %v480
    %v555 = vpop.permute.xlu0 %554
    %vm556 = vcmp.eq.s32.totalorder %v542, %v546
    %vm557 = vcmp.eq.s32.totalorder %v543, %v546
    %vm558 = vcmp.eq.s32.totalorder %v542, %v549
    %vm559 = vcmp.eq.s32.totalorder %v543, %v549
    %vm560 = vcmp.eq.s32.totalorder %v542, %v552
    %vm561 = vcmp.eq.s32.totalorder %v543, %v552
    %vm562 = vcmp.eq.s32.totalorder %v542, %v555
    %vm563 = vcmp.eq.s32.totalorder %v543, %v555
    %v564 = vsel %vm556, %v431, 0.0
    %v565 = vsel %vm557, %v433, 0.0
    %v566 = vsel %vm558, %v435, 0.0
    %v567 = vsel %vm559, %v437, 0.0
    %v568 = vsel %vm560, %v441, 0.0
    %v569 = vsel %vm561, %v443, 0.0
    %v570 = vsel %vm562, %v445, 0.0
    %v571 = vsel %vm563, %v447, 0.0
    %v572 = vadd.f32 %v564, %v565
    %573 = vadd.xlane.f32.xlu0 %v572
    %v574 = vpop.xlane.xlu0 %573
    %v575 = vadd.f32 %v566, %v567
    %576 = vadd.xlane.f32.xlu0 %v575
    %v577 = vpop.xlane.xlu0 %576
    %v578 = vadd.f32 %v568, %v569
    %579 = vadd.xlane.f32.xlu0 %v578
    %v580 = vpop.xlane.xlu0 %579
    %v581 = vadd.f32 %v570, %v571
    %582 = vadd.xlane.f32.xlu0 %v581
    %v583 = vpop.xlane.xlu0 %582
    %v584 = vsub.f32 %v537, %v574
    %v585 = vsub.f32 %v538, %v577
    %v586 = vsub.f32 %v539, %v580
    %v587 = vsub.f32 %v540, %v583
    %vm588 = vcmp.ne.s32.totalorder %v477, 4294967196
    %vm589 = vcmp.ne.s32.totalorder %v478, 4294967196
    %vm590 = vcmp.ne.s32.totalorder %v479, 4294967196
    %vm591 = vcmp.ne.s32.totalorder %v480, 4294967196
    %v592 = vsel %vm588, 1, 0
    %v593 = vsel %vm589, 1, 0
    %v594 = vsel %vm590, 1, 0
    %v595 = vsel %vm591, 1, 0
    %v596 = vcvt.s32.f32 %v592
    %v597 = vcvt.s32.f32 %v593
    %v598 = vcvt.s32.f32 %v594
    %v599 = vcvt.s32.f32 %v595
    %v600 = vmul.f32 %v584, %v596
    %v601 = vmul.f32 %v585, %v597
    %v602 = vmul.f32 %v586, %v598
    %v603 = vmul.f32 %v587, %v599
    %vm604 = vcmask 7168
    %v605 = vsel %vm604, %v600, 0.0
    %v606 = vsel %vm604, %v601, 0.0
    %v607 = vadd.f32 %v605, %v606
    %v608 = vsel %vm604, %v602, 0.0
    %v609 = vadd.f32 %v607, %v608
    %v610 = vsel %vm604, %v603, 0.0
    %v611 = vadd.f32 %v609, %v610
    %612 = vadd.xlane.f32.xlu0 %v611
    %v613 = vpop.xlane.xlu0 %612
    %v614 = vrot.slane %v613, 4
    %v615 = vadd.f32 %v613, %v614
    %v616 = vrot.slane %v615, 2
    %v617 = vadd.f32 %v615, %v616
    %v618 = vrot.slane %v617, 1
    %v619 = vadd.f32 %v617, %v618
    %s620 = vtos %v619
    %v621 = vsel %vm604, %v596, 0.0
    %v622 = vsel %vm604, %v597, 0.0
    %v623 = vadd.f32 %v621, %v622
    %v624 = vsel %vm604, %v598, 0.0
    %v625 = vadd.f32 %v623, %v624
    %v626 = vsel %vm604, %v599, 0.0
    %v627 = vadd.f32 %v625, %v626
    %628 = vadd.xlane.f32.xlu0 %v627
    %v629 = vpop.xlane.xlu0 %628
    %v630 = vrot.slane %v629, 4
    %v631 = vadd.f32 %v629, %v630
    %v632 = vrot.slane %v631, 2
    %v633 = vadd.f32 %v631, %v632
    %v634 = vrot.slane %v633, 1
    %v635 = vadd.f32 %v633, %v634
    %s636 = vtos %v635
    %s637 = smax.f32 %s636, 1.0
    %v638 = vstv %s637
    %v639 = vrcp.pop %v638
    %s640 = vtos %v639
    %s641 = smul.f32 %s620, %s640
    %v642 = vstv %s641
    %643 = vst [vmem:[#allocation2] sm:$0x1] %v642
    // Predicated region
    $region34: #{forward.3} parent=1 // pred_check
      _
    $region35: #{forward.3} parent=1 // pred_check_branch
      %645 = sbr.rel (0) target = $region37
    $region36: #{forward.3} parent=1 // pred_region
      _
    $region37: #{forward.3} parent=1 // pred_fallthru
      _
    // Predicated region
    $region38: #{forward.3} parent=1 // pred_check
      _
    $region39: #{forward.3} parent=1 // pred_check_branch
      %647 = sbr.rel (0) target = $region41
    $region40: #{forward.3} parent=1 // pred_region
      %s649 = ssub.s32 16, 16
      %650 = vsyncadd [#allocation3], %s649
      %s652 = sshll.u32 [#allocation2], 4
      %s653 = int_to_ptr.vmem [resolvable:$true] %s652
      %655 = dma.vmem_to_hbm [thread:$0]  %s653, 16, %s9, [#allocation3]
    $region41: #{forward.3} parent=1 // pred_fallthru
      _
    // Predicated region
    $region42: #{forward.3} parent=1 // pred_check
      _
    $region43: #{forward.3} parent=1 // pred_check_branch
      %657 = sbr.rel (0) target = $region45
    $region44: #{forward.3} parent=1 // pred_region
      _
    $region45: #{forward.3} parent=1 // pred_fallthru
      _
    // Predicated region
    $region46: #{forward.3} parent=1 // pred_check
      _
    $region47: #{forward.3} parent=1 // pred_check_branch
      %659 = sbr.rel (0) target = $region49
    $region48: #{forward.3} parent=1 // pred_region
      %660 = dma.done [#allocation3], 16
    $region49: #{forward.3} parent=1 // pred_fallthru
      _
    %661 = vsyncpa [#allocation3], 1

</llo_original>
